<compile_context>
chip_gen: v7x
topology: tpu7x:2x2x1
jax: 0.10.0
libtpu: 0.0.40
codegen_flags: <defaults>
</compile_context>

<pallas_src>
import functools
import math

import jax
import jax.numpy as jnp
from jax import lax
from jax.experimental import pallas as pl
from jax.experimental.pallas import tpu as pltpu

NEG_BIG = -9.0e15  # same sentinel as the PyTorch module (not rescaled by 1/sqrt(H);
                   # both underflow to exp()=0 in f32, see correctness notes)


def _attention_kernel(bias_t_ref, dest_ref, src_ref, ft_ref, w_ref, ww2_ref, out_ref,
                      *, bblk, n_dest, n_src):
    # Refs per grid step (one batch block of `bblk` instances):
    #   bias_t_ref (bblk, N_src, N_dest)   adjacency, transposed
    #   dest_ref   (bblk*N_dest, in_dim)   flattened over the batch block
    #   src_ref    (bblk*N_src,  in_dim)
    #   ft_ref     (bblk, N_src, 1)        observed-value column
    #   w_ref      (in_dim, H),  ww2_ref (in_dim, H) = W @ W2 (precomputed, shared)
    #   out_ref    (bblk, 1, N_dest)       lane-dense result rows

    # Batch-flattened projections: one MXU push each instead of bblk tiny ones.
    h1_all = jnp.dot(src_ref[...], w_ref[...], preferred_element_type=jnp.float32)      # (bblk*N_src, H)
    hidden = h1_all.shape[1]
    hw2_all = jnp.dot(dest_ref[...], ww2_ref[...], preferred_element_type=jnp.float32)  # (bblk*N_dest, H)
    # Fold softmax 1/sqrt(hidden) here (LeakyReLU is positively homogeneous -> exact).
    hw2_all = hw2_all * (1.0 / math.sqrt(hidden))

    # Static unrolled loop over instances in this block (tiny tiles, short trip count).
    for b in range(bblk):
        h1 = h1_all[b * n_src:(b + 1) * n_src, :]        # (N_src, H)   static, tile-aligned slice
        hw2 = hw2_all[b * n_dest:(b + 1) * n_dest, :]    # (N_dest, H)
        ft = ft_ref[b]                                   # (N_src, 1)
        nan_col = jnp.isnan(ft)                          # (N_src, 1)
        ft_clean = jnp.where(nan_col, jnp.zeros_like(ft), ft)

        # e^T = h1 @ hw2^T : contraction on both operands' last axis.
        # (Review item: checked via pl.lower_as_mlir at these shapes that Mosaic feeds
        #  the transposed operand to the MXU without a materialized VMEM transpose.)
        e_t = lax.dot_general(h1, hw2, dimension_numbers=(((1,), (1,)), ((), ())),
                              preferred_element_type=jnp.float32)    # (N_src, N_dest)
        e_t = jnp.where(e_t > 0, e_t, 0.2 * e_t)          # LeakyReLU(0.2)
        # TODO(synk): training-mode dropout would need pltpu.prng_seed/prng_random_bits.

        # Fused adjacency + NaN-source masking: one VPU select, no full_like sentinel tile.
        keep = jnp.logical_and(bias_t_ref[b] > 0, jnp.logical_not(nan_col))  # (N_src, N_dest)
        att = jnp.where(keep, e_t, NEG_BIG)

        # Softmax over the src (sublane) axis with deferred normalization.
        m = jnp.max(att, axis=0, keepdims=True)            # (1, N_dest)
        p = jnp.exp(att - m)                               # (N_src, N_dest)
        s = jnp.sum(p, axis=0, keepdims=True)              # (1, N_dest)
        num = jnp.sum(p * ft_clean, axis=0, keepdims=True)  # (1, N_dest)

        out_ref[b] = num / s                               # lane-dense (1, N_dest) store


def attention_layer_batched(bias, emb_dest, emb_src, feature_src, W, W2, *, batch_blocks=1):
    """Batched Pallas forward.

    bias (B, N_dest, N_src); emb_dest (B, N_dest, in_dim); emb_src (B, N_src, in_dim);
    feature_src (B, N_src) or (B, N_src, 1); W (in_dim, hidden); W2 (hidden, hidden).
    Returns (B, N_dest, 1).

    batch_blocks: number of grid steps the batch is split into.  Default 1 = one fat
    step (best on single-TensorCore v5e/v6e).  Use 2 on v7x so each TensorCore gets
    one fat step.
    """
    bias = jnp.asarray(bias, jnp.float32)
    B, n_dest, n_src = bias.shape
    emb_dest = jnp.asarray(emb_dest, jnp.float32)
    emb_src = jnp.asarray(emb_src, jnp.float32)
    in_dim = emb_dest.shape[-1]
    W = jnp.asarray(W, jnp.float32)
    W2 = jnp.asarray(W2, jnp.float32)
    hidden = W.shape[-1]

    if batch_blocks <= 0 or B % batch_blocks != 0:
        batch_blocks = 1
    bblk = B // batch_blocks

    # Shared-weight precompute: (dest @ W) @ W2 == dest @ (W @ W2).  One fewer MXU
    # matmul per instance; HIGHEST precision keeps the fold ~exact in f32.
    WW2 = jnp.dot(W, W2, precision=lax.Precision.HIGHEST)            # (in_dim, hidden)

    # Transposed attention layout (src on sublanes, dest on lanes) so the per-instance
    # result is a lane-dense (1, N_dest) row; flattened embeddings so each grid step
    # gets one dense DMA + one MXU push per projection.
    bias_t = jnp.transpose(bias, (0, 2, 1))                           # (B, N_src, N_dest)
    dest_flat = emb_dest.reshape(B * n_dest, in_dim)
    src_flat = emb_src.reshape(B * n_src, in_dim)
    ft = jnp.asarray(feature_src, jnp.float32).reshape(B, n_src, 1)

    kernel = functools.partial(_attention_kernel, bblk=bblk, n_dest=n_dest, n_src=n_src)

    out = pl.pallas_call(
        kernel,
        out_shape=jax.ShapeDtypeStruct((B, 1, n_dest), jnp.float32),
        grid=(batch_blocks,),
        in_specs=[
            pl.BlockSpec((bblk, n_src, n_dest), lambda g: (g, 0, 0)),    # bias^T
            pl.BlockSpec((bblk * n_dest, in_dim), lambda g: (g, 0)),     # emb_dest (flat)
            pl.BlockSpec((bblk * n_src, in_dim), lambda g: (g, 0)),      # emb_src  (flat)
            pl.BlockSpec((bblk, n_src, 1), lambda g: (g, 0, 0)),         # feature column
            pl.BlockSpec((in_dim, hidden), lambda g: (0, 0)),            # W   (shared)
            pl.BlockSpec((in_dim, hidden), lambda g: (0, 0)),            # W@W2 (shared)
        ],
        out_specs=pl.BlockSpec((bblk, 1, n_dest), lambda g: (g, 0, 0)),
        compiler_params=pltpu.CompilerParams(dimension_semantics=("parallel",)),
    )(bias_t, dest_flat, src_flat, ft, W, WW2)

    return out.reshape(B, n_dest, 1)


def attention_layer(bias, emb_dest, emb_src, feature_src, W, W2):
    """Single-instance Pallas forward matching AttentionLayer.forward (eval mode)."""
    out = attention_layer_batched(
        jnp.asarray(bias)[None], jnp.asarray(emb_dest)[None], jnp.asarray(emb_src)[None],
        jnp.asarray(feature_src).reshape(1, -1), W, W2)
    return out[0]


def _xavier_normal(key, shape, gain=1.0):
    fan_in, fan_out = shape
    std = gain * math.sqrt(2.0 / (fan_in + fan_out))
    return std * jax.random.normal(key, shape, dtype=jnp.float32)


def _reference(bias, emb_dest, emb_src, feature_src, W, W2):
    # Pure-JAX mirror of the PyTorch forward (eval mode).
    h1 = emb_src @ W
    h2 = emb_dest @ W
    ft = feature_src.reshape(-1)
    nan_ind = jnp.isnan(ft)
    ft_clean = jnp.where(nan_ind, 0.0, ft)
    e = (h2 @ W2) @ h1.T
    e = jnp.where(e > 0, e, 0.2 * e)
    att = jnp.where(bias > 0, e, NEG_BIG)
    att = jnp.where(nan_ind[None, :], NEG_BIG, att)
    att = jax.nn.softmax(att / jnp.sqrt(jnp.float32(h1.shape[1])), axis=1)
    return att @ ft_clean.reshape(-1, 1)


if __name__ == "__main__":
    key = jax.random.PRNGKey(0)
    k_w, k_w2, k_dest, k_src, k_ft, k_bias = jax.random.split(key, 6)

    N_DEST, N_SRC, IN_DIM, HIDDEN, BATCH = 16, 24, 8, 32, 4

    W = _xavier_normal(k_w, (IN_DIM, HIDDEN), gain=1.0)
    W2 = _xavier_normal(k_w2, (HIDDEN, HIDDEN), gain=1.0)

    emb_dest = jax.random.normal(k_dest, (BATCH, N_DEST, IN_DIM), dtype=jnp.float32)
    emb_src = jax.random.normal(k_src, (BATCH, N_SRC, IN_DIM), dtype=jnp.float32)
    feature_src = jax.random.normal(k_ft, (BATCH, N_SRC), dtype=jnp.float32)
    # inject NaNs to exercise NaN-column masking
    feature_src = feature_src.at[0, 3].set(jnp.nan).at[1, 10].set(jnp.nan).at[3, 0].set(jnp.nan)

    bias = (jax.random.uniform(k_bias, (BATCH, N_DEST, N_SRC)) > 0.4).astype(jnp.float32)
    bias = bias.at[:, :, 1].set(1.0)  # every row keeps at least one non-NaN edge

    # --- single-instance path (matches the PyTorch module's forward signature) ---
    out1 = attention_layer(bias[0], emb_dest[0], emb_src[0], feature_src[0], W, W2)
    out1 = jax.block_until_ready(out1)
    ref1 = _reference(bias[0], emb_dest[0], emb_src[0], feature_src[0], W, W2)
    assert out1.shape == (N_DEST, 1)
    assert jnp.allclose(out1, ref1, atol=1e-4, rtol=1e-4), (out1, ref1)

    ref_b = jax.vmap(lambda bi, ed, es, fs: _reference(bi, ed, es, fs, W, W2))(
        bias, emb_dest, emb_src, feature_src)

    # --- batched path: whole batch in ONE fat grid step (v5e/v6e default) ---
    out_b = attention_layer_batched(bias, emb_dest, emb_src, feature_src, W, W2)
    out_b = jax.block_until_ready(out_b)
    assert out_b.shape == (BATCH, N_DEST, 1)
    assert jnp.allclose(out_b, ref_b, atol=1e-4, rtol=1e-4), (out_b, ref_b)

    # --- v7x-style split: 2 fat grid steps, dimension_semantics=("parallel",) so
    #     each TensorCore gets one step; identical numerics. ---
    out_b2 = attention_layer_batched(bias, emb_dest, emb_src, feature_src, W, W2,
                                     batch_blocks=2)
    out_b2 = jax.block_until_ready(out_b2)
    assert jnp.allclose(out_b2, ref_b, atol=1e-4, rtol=1e-4), (out_b2, ref_b)

    print("KERNEL_OK")
</pallas_src>

<mosaic_0001>
module attributes {stable_mosaic.version = 11 : i64} {
  func.func @_attention_kernel(%arg0: i32, %arg1: memref<1x24x16xf32, #tpu.memory_space<vmem>>, %arg2: memref<16x8xf32, #tpu.memory_space<vmem>>, %arg3: memref<24x8xf32, #tpu.memory_space<vmem>>, %arg4: memref<1x24x1xf32, #tpu.memory_space<vmem>>, %arg5: memref<8x32xf32, #tpu.memory_space<vmem>>, %arg6: memref<8x32xf32, #tpu.memory_space<vmem>>, %arg7: memref<1x1x16xf32, #tpu.memory_space<vmem>>) attributes {dimension_semantics = [#tpu.dimension_semantics<parallel>], iteration_bounds = array<i64: 1>, scalar_prefetch = 0 : i64, scratch_operands = 0 : i64, tpu.core_type = #tpu.core_type<tc>, window_params = [{transform_indices = @transform_0, window_bounds = array<i64: 1, 24, 16>}, {transform_indices = @transform_1, window_bounds = array<i64: 16, 8>}, {transform_indices = @transform_2, window_bounds = array<i64: 24, 8>}, {transform_indices = @transform_3, window_bounds = array<i64: 1, 24, 1>}, {pipeline_mode = #tpu.pipeline_mode<synchronous>, transform_indices = @transform_4, window_bounds = array<i64: 8, 32>}, {pipeline_mode = #tpu.pipeline_mode<synchronous>, transform_indices = @transform_5, window_bounds = array<i64: 8, 32>}, {transform_indices = @transform_6, window_bounds = array<i64: 1, 1, 16>}]} {
    %c0 = arith.constant 0 : index
    %c0_0 = arith.constant 0 : index
    %0 = vector.load %arg3[%c0, %c0_0] : memref<24x8xf32, #tpu.memory_space<vmem>>, vector<24x8xf32>
    %c0_1 = arith.constant 0 : index
    %c0_2 = arith.constant 0 : index
    %1 = vector.load %arg5[%c0_1, %c0_2] : memref<8x32xf32, #tpu.memory_space<vmem>>, vector<8x32xf32>
    %cst = arith.constant dense<0.000000e+00> : vector<24x32xf32>
    %2 = tpu.matmul %0, %1, %cst {dimension_numbers = #tpu.dot_dimension_numbers<[1], [0], [0], [1], [0, 0, 1, 1], [], []>} : vector<24x8xf32>, vector<8x32xf32>, vector<24x32xf32> -> vector<24x32xf32>
    %c0_3 = arith.constant 0 : index
    %c0_4 = arith.constant 0 : index
    %3 = vector.load %arg2[%c0_3, %c0_4] : memref<16x8xf32, #tpu.memory_space<vmem>>, vector<16x8xf32>
    %c0_5 = arith.constant 0 : index
    %c0_6 = arith.constant 0 : index
    %4 = vector.load %arg6[%c0_5, %c0_6] : memref<8x32xf32, #tpu.memory_space<vmem>>, vector<8x32xf32>
    %cst_7 = arith.constant dense<0.000000e+00> : vector<16x32xf32>
    %5 = tpu.matmul %3, %4, %cst_7 {dimension_numbers = #tpu.dot_dimension_numbers<[1], [0], [0], [1], [0, 0, 1, 1], [], []>} : vector<16x8xf32>, vector<8x32xf32>, vector<16x32xf32> -> vector<16x32xf32>
    %cst_8 = arith.constant 0.176776692 : f32
    %6 = vector.broadcast %cst_8 : f32 to vector<16x32xf32>
    %7 = arith.mulf %5, %6 : vector<16x32xf32>
    %c0_9 = arith.constant 0 : index
    %c0_10 = arith.constant 0 : index
    %c0_11 = arith.constant 0 : index
    %8 = vector.load %arg4[%c0_9, %c0_10, %c0_11] : memref<1x24x1xf32, #tpu.memory_space<vmem>>, vector<1x24x1xf32>
    %9 = vector.shape_cast %8 : vector<1x24x1xf32> to vector<24x1xf32>
    %10 = arith.cmpf one, %9, %9 : vector<24x1xf32>
    %cst_12 = arith.constant 0.000000e+00 : f32
    %11 = vector.broadcast %cst_12 : f32 to vector<24x1xf32>
    %12 = arith.select %10, %11, %9 : vector<24x1xi1>, vector<24x1xf32>
    %cst_13 = arith.constant dense<0.000000e+00> : vector<24x16xf32>
    %13 = tpu.matmul %2, %7, %cst_13 {dimension_numbers = #tpu.dot_dimension_numbers<[1], [1], [0], [0], [0, 0, 1, 0], [], []>} : vector<24x32xf32>, vector<16x32xf32>, vector<24x16xf32> -> vector<24x16xf32>
    %cst_14 = arith.constant 0.000000e+00 : f32
    %14 = vector.broadcast %cst_14 : f32 to vector<24x16xf32>
    %15 = arith.cmpf ogt, %13, %14 : vector<24x16xf32>
    %cst_15 = arith.constant 2.000000e-01 : f32
    %16 = vector.broadcast %cst_15 : f32 to vector<24x16xf32>
    %17 = arith.mulf %16, %13 : vector<24x16xf32>
    %18 = arith.select %15, %13, %17 : vector<24x16xi1>, vector<24x16xf32>
    %c0_16 = arith.constant 0 : index
    %c0_17 = arith.constant 0 : index
    %c0_18 = arith.constant 0 : index
    %19 = vector.load %arg1[%c0_16, %c0_17, %c0_18] : memref<1x24x16xf32, #tpu.memory_space<vmem>>, vector<1x24x16xf32>
    %20 = vector.shape_cast %19 : vector<1x24x16xf32> to vector<24x16xf32>
    %cst_19 = arith.constant 0.000000e+00 : f32
    %21 = vector.broadcast %cst_19 : f32 to vector<24x16xf32>
    %22 = arith.cmpf ogt, %20, %21 : vector<24x16xf32>
    %cst_20 = arith.constant dense<true> : vector<24x1xi1>
    %23 = arith.xori %10, %cst_20 : vector<24x1xi1>
    %24 = vector.broadcast %23 : vector<24x1xi1> to vector<24x16xi1>
    %25 = arith.andi %22, %24 : vector<24x16xi1>
    %cst_21 = arith.constant -9.000000e+15 : f32
    %26 = vector.broadcast %cst_21 : f32 to vector<24x16xf32>
    %27 = arith.select %25, %18, %26 : vector<24x16xi1>, vector<24x16xf32>
    %cst_22 = arith.constant dense<0xFF800000> : vector<16xf32>
    %28 = vector.multi_reduction <maximumf>, %27, %cst_22 [0] : vector<24x16xf32> to vector<16xf32>
    %29 = vector.shape_cast %28 : vector<16xf32> to vector<1x16xf32>
    %30 = vector.broadcast %29 : vector<1x16xf32> to vector<24x16xf32>
    %31 = arith.subf %27, %30 : vector<24x16xf32>
    %32 = math.exp %31 : vector<24x16xf32>
    %cst_23 = arith.constant dense<0.000000e+00> : vector<16xf32>
    %33 = vector.multi_reduction <add>, %32, %cst_23 [0] : vector<24x16xf32> to vector<16xf32>
    %34 = vector.shape_cast %33 : vector<16xf32> to vector<1x16xf32>
    %35 = vector.broadcast %12 : vector<24x1xf32> to vector<24x16xf32>
    %36 = arith.mulf %32, %35 : vector<24x16xf32>
    %cst_24 = arith.constant dense<0.000000e+00> : vector<16xf32>
    %37 = vector.multi_reduction <add>, %36, %cst_24 [0] : vector<24x16xf32> to vector<16xf32>
    %38 = vector.shape_cast %37 : vector<16xf32> to vector<1x16xf32>
    %39 = arith.divf %38, %34 : vector<1x16xf32>
    %c0_25 = arith.constant 0 : index
    %c0_26 = arith.constant 0 : index
    %c0_27 = arith.constant 0 : index
    %40 = vector.load %arg7[%c0_25, %c0_26, %c0_27] : memref<1x1x16xf32, #tpu.memory_space<vmem>>, vector<1x1x16xf32>
    %41 = vector.shape_cast %40 : vector<1x1x16xf32> to vector<1x16xf32>
    %42 = vector.shape_cast %39 : vector<1x16xf32> to vector<1x1x16xf32>
    tpu.vector_store %arg7[%c0_25, %c0_26, %c0_27], %42 {strides = array<i32>} : memref<1x1x16xf32, #tpu.memory_space<vmem>>, vector<1x1x16xf32>,
    return
  }
  func.func @transform_0(%arg0: i32) -> (i32, i32, i32) {
    %c0_i32 = arith.constant 0 : i32
    %c0_i32_0 = arith.constant 0 : i32
    %c0_i32_1 = arith.constant 0 : i32
    return %arg0, %c0_i32, %c0_i32_0 : i32, i32, i32
  }
  func.func @transform_1(%arg0: i32) -> (i32, i32) {
    %c0_i32 = arith.constant 0 : i32
    %c0_i32_0 = arith.constant 0 : i32
    return %arg0, %c0_i32 : i32, i32
  }
  func.func @transform_2(%arg0: i32) -> (i32, i32) {
    %c0_i32 = arith.constant 0 : i32
    %c0_i32_0 = arith.constant 0 : i32
    return %arg0, %c0_i32 : i32, i32
  }
  func.func @transform_3(%arg0: i32) -> (i32, i32, i32) {
    %c0_i32 = arith.constant 0 : i32
    %c0_i32_0 = arith.constant 0 : i32
    %c0_i32_1 = arith.constant 0 : i32
    return %arg0, %c0_i32, %c0_i32_0 : i32, i32, i32
  }
  func.func @transform_4(%arg0: i32) -> (i32, i32) {
    %c0_i32 = arith.constant 0 : i32
    %c0_i32_0 = arith.constant 0 : i32
    %c0_i32_1 = arith.constant 0 : i32
    return %c0_i32, %c0_i32_0 : i32, i32
  }
  func.func @transform_5(%arg0: i32) -> (i32, i32) {
    %c0_i32 = arith.constant 0 : i32
    %c0_i32_0 = arith.constant 0 : i32
    %c0_i32_1 = arith.constant 0 : i32
    return %c0_i32, %c0_i32_0 : i32, i32
  }
  func.func @transform_6(%arg0: i32) -> (i32, i32, i32) {
    %c0_i32 = arith.constant 0 : i32
    %c0_i32_0 = arith.constant 0 : i32
    %c0_i32_1 = arith.constant 0 : i32
    return %arg0, %c0_i32, %c0_i32_0 : i32, i32, i32
  }
}

</mosaic_0001>

<llo_original>
// kernel: tpu_custom_call.1
$region0: #{tpu_custom_call.1}
  #allocation0 [shape = 'u32[]', space=smem, size = 0x4, offset = 0x4, fixed_abs, tag = 'smem constant byte address 0x4 - core index']
  #allocation1 [shape = 'u32[144,128]{1,0:T(1,128)}', space=vmem, size = 0x12000, scoped, tag = 'internal scratch']
  %s0 = inlined_call_operand.vmem [shape: f32[1,24,16], index: 0, kind: input, shape index: {}]
  %s1 = inlined_call_operand.vmem [shape: f32[16,8], index: 1, kind: input, shape index: {}]
  %s2 = inlined_call_operand.vmem [shape: f32[24,8], index: 2, kind: input, shape index: {}]
  %s3 = inlined_call_operand.vmem [shape: f32[1,24,1], index: 3, kind: input, shape index: {}]
  %s4 = inlined_call_operand.vmem [shape: f32[8,32], index: 4, kind: input, shape index: {}]
  %s5 = inlined_call_operand.vmem [shape: f32[8,32], index: 5, kind: input, shape index: {}]
  %s6 = inlined_call_operand.hbm [shape: f32[1,1,16], index: 6, kind: output, shape index: {}]
  %s7 = sld [smem:[#allocation0]]
  $region34: #{tpu_custom_call.1} parent=0
    _
  %s9 = ssub.s32 1, %s7
  %s10 = scalar_select 0, %s9, %s7
  $region1: #{tpu_custom_call.1} parent=0
    #allocation2 [shape = 'u8[512]{0}', space=vmem, size = 0x400, scoped, tag = 'output window, operand 0, single buffered']
    #allocation3 [shape = 's32[1]{0}', space=sflag, size = 0x4, scoped, tag = 'scoped memory for tpu_custom_call.1']
    %11 = vsyncpa [#allocation3], 0
    // Predicated region
    $region2: #{tpu_custom_call.1} parent=1 // pred_check
      _
    $region3: #{tpu_custom_call.1} parent=1 // pred_check_branch
      %13 = sbr.rel (0) target = $region5
    $region4: #{tpu_custom_call.1} parent=1 // pred_region
      _
    $region5: #{tpu_custom_call.1} parent=1 // pred_fallthru
      _
    // Predicated region
    $region6: #{tpu_custom_call.1} parent=1 // pred_check
      _
    $region7: #{tpu_custom_call.1} parent=1 // pred_check_branch
      %15 = sbr.rel (0) target = $region9
    $region8: #{tpu_custom_call.1} parent=1 // pred_region
      _
    $region9: #{tpu_custom_call.1} parent=1 // pred_fallthru
      _
    // Predicated region
    $region10: #{tpu_custom_call.1} parent=1 // pred_check
      _
    $region11: #{tpu_custom_call.1} parent=1 // pred_check_branch
      %17 = sbr.rel (0) target = $region13
    $region12: #{tpu_custom_call.1} parent=1 // pred_region
      _
    $region13: #{tpu_custom_call.1} parent=1 // pred_fallthru
      _
    // Predicated region
    $region14: #{tpu_custom_call.1} parent=1 // pred_check
      _
    $region15: #{tpu_custom_call.1} parent=1 // pred_check_branch
      %19 = sbr.rel (0) target = $region17
    $region16: #{tpu_custom_call.1} parent=1 // pred_region
      _
    $region17: #{tpu_custom_call.1} parent=1 // pred_fallthru
      _
    // Predicated region
    $region18: #{tpu_custom_call.1} parent=1 // pred_check
      _
    $region19: #{tpu_custom_call.1} parent=1 // pred_check_branch
      %21 = sbr.rel (0) target = $region21
    $region20: #{tpu_custom_call.1} parent=1 // pred_region
      _
    $region21: #{tpu_custom_call.1} parent=1 // pred_fallthru
      _
    // Predicated region
    $region22: #{tpu_custom_call.1} parent=1 // pred_check
      _
    $region23: #{tpu_custom_call.1} parent=1 // pred_check_branch
      %23 = sbr.rel (0) target = $region25
    $region24: #{tpu_custom_call.1} parent=1 // pred_region
      _
    $region25: #{tpu_custom_call.1} parent=1 // pred_fallthru
      _
    %v24 = vld [vmem:[%s2] sm:$0xff]
    %v25 = vld [vmem:[%s2 + $0x8] sm:$0xff]
    %v26 = vld [vmem:[%s2 + $0x10] sm:$0xff]
    %v27 = vld [vmem:[%s4] sm:$0xff]
    %vm28 = vcmask 64512
    %v30 = vsel %vm28, %v24, 0
    %v33 = vsel %vm28, %v25, 0
    %v36 = vsel %vm28, %v26, 0
    %38 = vmatprep.subr.mxu0 0.0
    %39 = vmatpush1.msra.mxu0 %v27
    %40 = vmatprep.subr.mxu0 0.0
    %41 = vmatpush1.msra.mxu0 0.0
    %42 = vmatprep.subr.mxu0 0.0
    %43 = vmatpush1.msra.mxu0 0.0
    %44 = vmatprep.subr.mxu0 0.0
    %45 = vmatpush1.msra.mxu0 0.0
    %46 = vmatprep.subr.mxu0 0.0
    %47 = vmatpush1.msra.mxu0 0.0
    %48 = vmatprep.subr.mxu0 0.0
    %49 = vmatpush1.msra.mxu0 0.0
    %50 = vmatprep.subr.mxu0 0.0
    %51 = vmatpush1.msra.mxu0 0.0
    %52 = vmatprep.subr.mxu0 0.0
    %53 = vmatpush1.msra.mxu0 0.0
    %54 = vmatprep.subr.mxu0 0.0
    %55 = vmatpush1.msra.mxu0 0.0
    %56 = vmatprep.subr.mxu0 0.0
    %57 = vmatpush1.msra.mxu0 0.0
    %58 = vmatprep.subr.mxu0 0.0
    %59 = vmatpush1.msra.mxu0 0.0
    %60 = vmatprep.subr.mxu0 0.0
    %61 = vmatpush1.msra.mxu0 0.0
    %62 = vmatprep.subr.mxu0 0.0
    %63 = vmatpush1.msra.mxu0 0.0
    %64 = vmatprep.subr.mxu0 0.0
    %65 = vmatpush1.msra.mxu0 0.0
    %66 = vmatprep.subr.mxu0 0.0
    %67 = vmatpush1.msra.mxu0 0.0
    %68 = vmatprep.subr.mxu0 0.0
    %69 = vmatpush1.msra.mxu0 0.0
    %70 = vmatprep.subr.mxu0 0.0
    %71 = vmatpush1.msra.mxu0 0.0
    %72 = vmatprep.subr.mxu0 0.0
    %73 = vmatpush1.msra.mxu0 0.0
    %74 = vmatprep.subr.mxu0 0.0
    %75 = vmatpush1.msra.mxu0 0.0
    %76 = vmatprep.subr.mxu0 0.0
    %77 = vmatpush1.msra.mxu0 0.0
    %78 = vmatprep.subr.mxu0 0.0
    %79 = vmatpush1.msra.mxu0 0.0
    %80 = vmatprep.subr.mxu0 0.0
    %81 = vmatpush1.msra.mxu0 0.0
    %82 = vmatprep.subr.mxu0 0.0
    %83 = vmatpush1.msra.mxu0 0.0
    %84 = vmatprep.subr.mxu0 0.0
    %85 = vmatpush1.msra.mxu0 0.0
    %86 = vmatprep.subr.mxu0 0.0
    %87 = vmatpush1.msra.mxu0 0.0
    %88 = vmatprep.subr.mxu0 0.0
    %89 = vmatpush1.msra.mxu0 0.0
    %90 = vmatprep.subr.mxu0 0.0
    %91 = vmatpush1.msra.mxu0 0.0
    %92 = vmatprep.subr.mxu0 0.0
    %93 = vmatpush1.msra.mxu0 0.0
    %94 = vmatprep.subr.mxu0 0.0
    %95 = vmatpush1.msra.mxu0 0.0
    %96 = vmatprep.subr.mxu0 0.0
    %97 = vmatpush1.msra.mxu0 0.0
    %98 = vmatprep.subr.mxu0 0.0
    %99 = vmatpush1.msra.mxu0 0.0
    %100 = vmatprep.subr.mxu0 0.0
    %101 = vmatpush1.msra.mxu0 0.0
    %102 = vmatprep.mubr.f32.mxu0 0.0
    %103 = vmatmul.mubr.f32.gmra.mrb[0].mxu0 %v30
    %v104 = vpop.f32.mrb[0].mxu0
    %v105 = vadd.f32 0.0, %v104
    %v106 = vpop.f32.mrb[0].mxu0
    %107 = vmatprep.mubr.f32.mxu0 0.0
    %108 = vmatmul.mubr.f32.gmra.mrb[0].mxu0 %v33
    %v109 = vpop.f32.mrb[0].mxu0
    %v110 = vadd.f32 0.0, %v109
    %v111 = vpop.f32.mrb[0].mxu0
    %112 = vmatprep.mubr.f32.mxu0 0.0
    %113 = vmatmul.mubr.f32.gmra.mrb[0].mxu0 %v36
    %v114 = vpop.f32.mrb[0].mxu0
    %v115 = vadd.f32 0.0, %v114
    %v116 = vpop.f32.mrb[0].mxu0
    %117 = vdwg.mxu0
    %v118 = vld [vmem:[%s1] sm:$0xff]
    %v119 = vld [vmem:[%s1 + $0x8] sm:$0xff]
    %v120 = vld [vmem:[%s5] sm:$0xff]
    %v122 = vsel %vm28, %v118, 0
    %v125 = vsel %vm28, %v119, 0
    %127 = vmatprep.subr.mxu0 0.0
    %128 = vmatpush1.msra.mxu0 %v120
    %129 = vmatprep.subr.mxu0 0.0
    %130 = vmatpush1.msra.mxu0 0.0
    %131 = vmatprep.subr.mxu0 0.0
    %132 = vmatpush1.msra.mxu0 0.0
    %133 = vmatprep.subr.mxu0 0.0
    %134 = vmatpush1.msra.mxu0 0.0
    %135 = vmatprep.subr.mxu0 0.0
    %136 = vmatpush1.msra.mxu0 0.0
    %137 = vmatprep.subr.mxu0 0.0
    %138 = vmatpush1.msra.mxu0 0.0
    %139 = vmatprep.subr.mxu0 0.0
    %140 = vmatpush1.msra.mxu0 0.0
    %141 = vmatprep.subr.mxu0 0.0
    %142 = vmatpush1.msra.mxu0 0.0
    %143 = vmatprep.subr.mxu0 0.0
    %144 = vmatpush1.msra.mxu0 0.0
    %145 = vmatprep.subr.mxu0 0.0
    %146 = vmatpush1.msra.mxu0 0.0
    %147 = vmatprep.subr.mxu0 0.0
    %148 = vmatpush1.msra.mxu0 0.0
    %149 = vmatprep.subr.mxu0 0.0
    %150 = vmatpush1.msra.mxu0 0.0
    %151 = vmatprep.subr.mxu0 0.0
    %152 = vmatpush1.msra.mxu0 0.0
    %153 = vmatprep.subr.mxu0 0.0
    %154 = vmatpush1.msra.mxu0 0.0
    %155 = vmatprep.subr.mxu0 0.0
    %156 = vmatpush1.msra.mxu0 0.0
    %157 = vmatprep.subr.mxu0 0.0
    %158 = vmatpush1.msra.mxu0 0.0
    %159 = vmatprep.subr.mxu0 0.0
    %160 = vmatpush1.msra.mxu0 0.0
    %161 = vmatprep.subr.mxu0 0.0
    %162 = vmatpush1.msra.mxu0 0.0
    %163 = vmatprep.subr.mxu0 0.0
    %164 = vmatpush1.msra.mxu0 0.0
    %165 = vmatprep.subr.mxu0 0.0
    %166 = vmatpush1.msra.mxu0 0.0
    %167 = vmatprep.subr.mxu0 0.0
    %168 = vmatpush1.msra.mxu0 0.0
    %169 = vmatprep.subr.mxu0 0.0
    %170 = vmatpush1.msra.mxu0 0.0
    %171 = vmatprep.subr.mxu0 0.0
    %172 = vmatpush1.msra.mxu0 0.0
    %173 = vmatprep.subr.mxu0 0.0
    %174 = vmatpush1.msra.mxu0 0.0
    %175 = vmatprep.subr.mxu0 0.0
    %176 = vmatpush1.msra.mxu0 0.0
    %177 = vmatprep.subr.mxu0 0.0
    %178 = vmatpush1.msra.mxu0 0.0
    %179 = vmatprep.subr.mxu0 0.0
    %180 = vmatpush1.msra.mxu0 0.0
    %181 = vmatprep.subr.mxu0 0.0
    %182 = vmatpush1.msra.mxu0 0.0
    %183 = vmatprep.subr.mxu0 0.0
    %184 = vmatpush1.msra.mxu0 0.0
    %185 = vmatprep.subr.mxu0 0.0
    %186 = vmatpush1.msra.mxu0 0.0
    %187 = vmatprep.subr.mxu0 0.0
    %188 = vmatpush1.msra.mxu0 0.0
    %189 = vmatprep.subr.mxu0 0.0
    %190 = vmatpush1.msra.mxu0 0.0
    %191 = vmatprep.mubr.f32.mxu0 0.0
    %192 = vmatmul.mubr.f32.gmra.mrb[0].mxu0 %v122
    %v193 = vpop.f32.mrb[0].mxu0
    %v194 = vadd.f32 0.0, %v193
    %v195 = vpop.f32.mrb[0].mxu0
    %196 = vmatprep.mubr.f32.mxu0 0.0
    %197 = vmatmul.mubr.f32.gmra.mrb[0].mxu0 %v125
    %v198 = vpop.f32.mrb[0].mxu0
    %v199 = vadd.f32 0.0, %v198
    %v200 = vpop.f32.mrb[0].mxu0
    %201 = vdwg.mxu0
    %v202 = vmul.f32 %v194, 0.17677669
    %v203 = vmul.f32 %v199, 0.17677669
    %v204 = vld [vmem:[%s3] sm:$0xff]
    %v205 = vld [vmem:[%s3 + $0x8] sm:$0xff]
    %v206 = vld [vmem:[%s3 + $0x10] sm:$0xff]
    %vm207 = vcmp.ne.f32.partialorder %v204, %v204
    %vm208 = vcmp.ne.f32.partialorder %v205, %v205
    %vm209 = vcmp.ne.f32.partialorder %v206, %v206
    %v210 = vsel %vm207, 0.0, %v204
    %v211 = vsel %vm208, 0.0, %v205
    %v212 = vsel %vm209, 0.0, %v206
    %vm213 = vcmask 261120
    %v215 = vsel %vm213, %v105, 0
    %v218 = vsel %vm213, %v110, 0
    %v221 = vsel %vm213, %v115, 0
    %v224 = vsel %vm213, %v202, 0
    %v227 = vsel %vm213, %v203, 0
    %229 = vmatprep.subr.mxu0 0.0
    %230 = vmatpush1.xpose.msra.mxu0 %v224
    %231 = vmatprep.subr.mxu0 0.0
    %232 = vmatpush1.xpose.msra.mxu0 %v227
    %233 = vmatprep.subr.mxu0 0.0
    %234 = vmatpush1.xpose.msra.mxu0 0.0
    %235 = vmatprep.subr.mxu0 0.0
    %236 = vmatpush1.xpose.msra.mxu0 0.0
    %237 = vmatprep.subr.mxu0 0.0
    %238 = vmatpush1.xpose.msra.mxu0 0.0
    %239 = vmatprep.subr.mxu0 0.0
    %240 = vmatpush1.xpose.msra.mxu0 0.0
    %241 = vmatprep.subr.mxu0 0.0
    %242 = vmatpush1.xpose.msra.mxu0 0.0
    %243 = vmatprep.subr.mxu0 0.0
    %244 = vmatpush1.xpose.msra.mxu0 0.0
    %245 = vmatprep.subr.mxu0 0.0
    %246 = vmatpush1.xpose.msra.mxu0 0.0
    %247 = vmatprep.subr.mxu0 0.0
    %248 = vmatpush1.xpose.msra.mxu0 0.0
    %249 = vmatprep.subr.mxu0 0.0
    %250 = vmatpush1.xpose.msra.mxu0 0.0
    %251 = vmatprep.subr.mxu0 0.0
    %252 = vmatpush1.xpose.msra.mxu0 0.0
    %253 = vmatprep.subr.mxu0 0.0
    %254 = vmatpush1.xpose.msra.mxu0 0.0
    %255 = vmatprep.subr.mxu0 0.0
    %256 = vmatpush1.xpose.msra.mxu0 0.0
    %257 = vmatprep.subr.mxu0 0.0
    %258 = vmatpush1.xpose.msra.mxu0 0.0
    %259 = vmatprep.subr.mxu0 0.0
    %260 = vmatpush1.xpose.msra.mxu0 0.0
    %261 = vmatprep.subr.mxu0 0.0
    %262 = vmatpush1.xpose.msra.mxu0 0.0
    %263 = vmatprep.subr.mxu0 0.0
    %264 = vmatpush1.xpose.msra.mxu0 0.0
    %265 = vmatprep.subr.mxu0 0.0
    %266 = vmatpush1.xpose.msra.mxu0 0.0
    %267 = vmatprep.subr.mxu0 0.0
    %268 = vmatpush1.xpose.msra.mxu0 0.0
    %269 = vmatprep.subr.mxu0 0.0
    %270 = vmatpush1.xpose.msra.mxu0 0.0
    %271 = vmatprep.subr.mxu0 0.0
    %272 = vmatpush1.xpose.msra.mxu0 0.0
    %273 = vmatprep.subr.mxu0 0.0
    %274 = vmatpush1.xpose.msra.mxu0 0.0
    %275 = vmatprep.subr.mxu0 0.0
    %276 = vmatpush1.xpose.msra.mxu0 0.0
    %277 = vmatprep.subr.mxu0 0.0
    %278 = vmatpush1.xpose.msra.mxu0 0.0
    %279 = vmatprep.subr.mxu0 0.0
    %280 = vmatpush1.xpose.msra.mxu0 0.0
    %281 = vmatprep.subr.mxu0 0.0
    %282 = vmatpush1.xpose.msra.mxu0 0.0
    %283 = vmatprep.subr.mxu0 0.0
    %284 = vmatpush1.xpose.msra.mxu0 0.0
    %285 = vmatprep.subr.mxu0 0.0
    %286 = vmatpush1.xpose.msra.mxu0 0.0
    %287 = vmatprep.subr.mxu0 0.0
    %288 = vmatpush1.xpose.msra.mxu0 0.0
    %289 = vmatprep.subr.mxu0 0.0
    %290 = vmatpush1.xpose.msra.mxu0 0.0
    %291 = vmatprep.subr.mxu0 0.0
    %292 = vmatpush1.xpose.msra.mxu0 0.0
    %293 = vmatprep.mubr.f32.mxu0 0.0
    %294 = vmatmul.mubr.f32.gmra.mrb[0].mxu0 %v215
    %v295 = vpop.f32.mrb[0].mxu0
    %v296 = vadd.f32 0.0, %v295
    %v297 = vpop.f32.mrb[0].mxu0
    %298 = vmatprep.mubr.f32.mxu0 0.0
    %299 = vmatmul.mubr.f32.gmra.mrb[0].mxu0 %v218
    %v300 = vpop.f32.mrb[0].mxu0
    %v301 = vadd.f32 0.0, %v300
    %v302 = vpop.f32.mrb[0].mxu0
    %303 = vmatprep.mubr.f32.mxu0 0.0
    %304 = vmatmul.mubr.f32.gmra.mrb[0].mxu0 %v221
    %v305 = vpop.f32.mrb[0].mxu0
    %v306 = vadd.f32 0.0, %v305
    %v307 = vpop.f32.mrb[0].mxu0
    %308 = vdwg.mxu0
    %vm309 = vcmp.gt.f32.partialorder %v296, 0.0
    %vm310 = vcmp.gt.f32.partialorder %v301, 0.0
    %vm311 = vcmp.gt.f32.partialorder %v306, 0.0
    %v312 = vmul.f32 %v296, 0.2
    %v313 = vmul.f32 %v301, 0.2
    %v314 = vmul.f32 %v306, 0.2
    %v315 = vsel %vm309, %v296, %v312
    %v316 = vsel %vm310, %v301, %v313
    %v317 = vsel %vm311, %v306, %v314
    %v318 = vld [vmem:[%s0] sm:$0xff]
    %v319 = vld [vmem:[%s0 + $0x8] sm:$0xff]
    %v320 = vld [vmem:[%s0 + $0x10] sm:$0xff]
    %vm321 = vcmp.gt.f32.partialorder %v318, 0.0
    %vm322 = vcmp.gt.f32.partialorder %v319, 0.0
    %vm323 = vcmp.gt.f32.partialorder %v320, 0.0
    %vm324 = vmxor %vm207, 1
    %vm325 = vmxor %vm208, 1
    %vm326 = vmxor %vm209, 1
    %v327 = vsel %vm324, 1, 0
    %v328 = vsel %vm325, 1, 0
    %v329 = vsel %vm326, 1, 0
    %330 = vset.pattern.permute.xlu0 0
    %331 = vperm.xlu0 %330, %v327
    %v332 = vpop.permute.xlu0 %331
    %333 = vset.pattern.permute.xlu0 0
    %334 = vperm.xlu0 %333, %v328
    %v335 = vpop.permute.xlu0 %334
    %336 = vset.pattern.permute.xlu0 0
    %337 = vperm.xlu0 %336, %v329
    %v338 = vpop.permute.xlu0 %337
    %vm339 = vcmp.eq.s32.totalorder %v332, 1
    %vm340 = vcmp.eq.s32.totalorder %v335, 1
    %vm341 = vcmp.eq.s32.totalorder %v338, 1
    %vm342 = vmand %vm321, %vm339
    %vm343 = vmand %vm322, %vm340
    %vm344 = vmand %vm323, %vm341
    %v345 = vsel %vm342, %v315, -9e+15
    %v346 = vsel %vm343, %v316, -9e+15
    %v347 = vsel %vm344, %v317, -9e+15
    %vm348 = vcmask 130048
    %v349 = vsel %vm348, %v345, -inf
    %v350 = vsel %vm348, %v346, -inf
    %v351 = vsel %vm348, %v347, -inf
    %v352 = vmax.f32 %v349, %v350
    %v353 = vmax.f32 %v352, %v351
    %v354 = vrot.slane %v353, 4
    %v355 = vmax.f32 %v353, %v354
    %v356 = vrot.slane %v355, 2
    %v357 = vmax.f32 %v355, %v356
    %v358 = vrot.slane %v357, 1
    %v359 = vmax.f32 %v357, %v358
    %v360 = vsub.f32 %v345, %v359
    %v361 = vsub.f32 %v346, %v359
    %v362 = vsub.f32 %v347, %v359
    %v363 = vmul.f32 %v360, 1.442695
    %v364 = vpow.pop %v363
    %v365 = vmul.f32 %v361, 1.442695
    %v366 = vpow.pop %v365
    %v367 = vmul.f32 %v362, 1.442695
    %v368 = vpow.pop %v367
    %v369 = vsel %vm348, %v364, 0.0
    %v370 = vsel %vm348, %v366, 0.0
    %v371 = vadd.f32 %v369, %v370
    %v372 = vsel %vm348, %v368, 0.0
    %v373 = vadd.f32 %v371, %v372
    %v374 = vrot.slane %v373, 4
    %v375 = vadd.f32 %v373, %v374
    %v376 = vrot.slane %v375, 2
    %v377 = vadd.f32 %v375, %v376
    %v378 = vrot.slane %v377, 1
    %v379 = vadd.f32 %v377, %v378
    %381 = vset.pattern.permute.xlu0 0
    %382 = vperm.xlu0 %381, %v210
    %v383 = vpop.permute.xlu0 %382
    %386 = vset.pattern.permute.xlu0 0
    %387 = vperm.xlu0 %386, %v211
    %v388 = vpop.permute.xlu0 %387
    %391 = vset.pattern.permute.xlu0 0
    %392 = vperm.xlu0 %391, %v212
    %v393 = vpop.permute.xlu0 %392
    %v395 = vmul.f32 %v364, %v383
    %v396 = vmul.f32 %v366, %v388
    %v397 = vmul.f32 %v368, %v393
    %v398 = vsel %vm348, %v395, 0.0
    %v399 = vsel %vm348, %v396, 0.0
    %v400 = vadd.f32 %v398, %v399
    %v401 = vsel %vm348, %v397, 0.0
    %v402 = vadd.f32 %v400, %v401
    %v403 = vrot.slane %v402, 4
    %v404 = vadd.f32 %v402, %v403
    %v405 = vrot.slane %v404, 2
    %v406 = vadd.f32 %v404, %v405
    %v407 = vrot.slane %v406, 1
    %v408 = vadd.f32 %v406, %v407
    %v409 = vrcp.pop %v379
    %v410 = vmul.f32 %v408, %v409
    %vm411 = vcmask 122880
    %412 = vst.msk [vmem:[#allocation2] sm:$0x1] %vm411, %v410
    // Predicated region
    $region26: #{tpu_custom_call.1} parent=1 // pred_check
      _
    $region27: #{tpu_custom_call.1} parent=1 // pred_check_branch
      %414 = sbr.rel (0) target = $region29
    $region28: #{tpu_custom_call.1} parent=1 // pred_region
      %s416 = ssub.s32 16, 16
      %417 = vsyncadd [#allocation3], %s416
      %s419 = sshll.u32 [#allocation2], 4
      %s420 = int_to_ptr.vmem [resolvable:$true] %s419
      %422 = dma.vmem_to_hbm [thread:$0]  %s420, 16, %s6, [#allocation3]
    $region29: #{tpu_custom_call.1} parent=1 // pred_fallthru
      _
    // Predicated region
    $region30: #{tpu_custom_call.1} parent=1 // pred_check
      _
    $region31: #{tpu_custom_call.1} parent=1 // pred_check_branch
      %424 = sbr.rel (0) target = $region33
    $region32: #{tpu_custom_call.1} parent=1 // pred_region
      %425 = dma.done [#allocation3], 16
    $region33: #{tpu_custom_call.1} parent=1 // pred_fallthru
      _
    %426 = vsyncpa [#allocation3], 1

</llo_original>
